<compile_context>
chip_gen: v7x
topology: tpu7x:2x2x1
jax: 0.10.0
libtpu: 0.0.40
codegen_flags: <defaults>
</compile_context>

<pallas_src>
import functools
import math

import jax
import jax.numpy as jnp
from jax.experimental import pallas as pl
from jax.experimental.pallas import tpu as pltpu

_LANE = 128
_SUBLANE = 8
_MXU_GRANULES = (256, 128, 16, _SUBLANE)   # tile-rounding tiers, best first


def _round_up(n, m):
    return ((n + m - 1) // m) * m


def _pad2d(a, rows, cols):
    r, c = a.shape
    if r == rows and c == cols:
        return a
    return jnp.pad(a, ((0, rows - r), (0, cols - c)))


def _tpu_vmem_info():
    """(per-core VMEM capacity bytes, probably-two-TensorCores) with fallbacks."""
    cap = None
    try:
        info = pltpu.get_tpu_info()
        cap = getattr(info, "vmem_capacity_bytes", None)
    except Exception:
        cap = None
    if cap is None:
        cap = 64 << 20            # conservative: assume v7x-sized VMEM per TC
    two_tc = cap <= (64 << 20)    # 64 MiB/TC is the v7x (2 TCs/chip) signature
    return int(cap), bool(two_tc)


def gated_mlp_kernel(x_ref, w1_ref, b1_ref, wg_ref, bg_ref, w2_ref, b2_ref,
                     out_ref, gate_ref, *, epi_dtype):
    # h1 = relu(x @ W1 + b1): MXU matmul with f32 accumulation; epilogue runs
    # in epi_dtype (f32 for f32 inputs, bf16 for bf16 inputs on bf16-VPU parts).
    h1 = jnp.dot(x_ref[...], w1_ref[...], preferred_element_type=jnp.float32)
    h1 = jnp.maximum(h1 + b1_ref[...].astype(jnp.float32), 0.0).astype(epi_dtype)

    # gate = sigmoid(h1 @ Wg + bg)
    g = jnp.dot(h1.astype(wg_ref.dtype), wg_ref[...],
                preferred_element_type=jnp.float32)
    g = jax.nn.sigmoid(g + bg_ref[...].astype(jnp.float32)).astype(epi_dtype)
    gate_ref[...] = g.astype(gate_ref.dtype)

    # out = (h1 * gate) @ W2 + b2
    o = jnp.dot((h1 * g).astype(w2_ref.dtype), w2_ref[...],
                preferred_element_type=jnp.float32)
    out_ref[...] = (o + b2_ref[...].astype(jnp.float32)).astype(out_ref.dtype)


def _pick_batch_tile(B, d_in_p, h_p, d_out_p, x_bytes, w_bytes, out_bytes,
                     gate_bytes, *, max_tile, budget_bytes, two_tc,
                     stream_buffers):
    """Largest MXU-aligned batch tile whose working set fits the VMEM budget."""
    B8 = _round_up(B, _SUBLANE)

    # Weights/biases are single-buffered (pl.Buffered(1), constant index_map).
    weight_bytes = ((d_in_p * h_p + h_p * h_p + h_p * d_out_p) * w_bytes
                    + (2 * h_p + d_out_p) * 4)
    if weight_bytes > budget_bytes // 2:
        raise ValueError(
            f"Resident weights ({weight_bytes >> 20} MiB) exceed half the VMEM "
            f"budget ({budget_bytes >> 20} MiB); this hidden size needs a "
            f"K/N-blocked gate-weight variant of this kernel.")

    # Per batch row: multi-buffered x / out / gate stream blocks plus in-body
    # intermediates (h1, g, their casts and the gating product), conservatively
    # charged as 5 x H_p f32 values per row.
    per_row = (stream_buffers * d_in_p * x_bytes
               + stream_buffers * d_out_p * out_bytes
               + stream_buffers * h_p * gate_bytes
               + 5 * h_p * 4)
    avail = budget_bytes - weight_bytes
    tb = min(max_tile, max(_SUBLANE, avail // per_row), B8)

    # On 2-TC parts keep >=4 grid steps so dimension_semantics=("parallel",)
    # can split the batch across cores and still pipeline on each core.
    if two_tc and B8 >= 4 * 256:
        tb = min(tb, B8 // 4)

    # Round down to an MXU/packing-friendly granule (256 keeps every vmatmul
    # issue full on v6e/v7x and is also 128-aligned for v5e; 16 keeps bf16
    # sublanes fully packed).
    granule = _SUBLANE
    for g in _MXU_GRANULES:
        if tb >= g:
            granule = g
            break
    tb = max(granule, (tb // granule) * granule)

    # Prefer a tile that divides the (sublane-rounded) batch so the batch pad
    # and the out/gate slices in the wrapper become no-ops.
    t = tb
    while t >= granule:
        if B8 % t == 0:
            return int(t)
        t -= granule
    return int(tb)


def gated_mlp(x, w1, b1, wg, bg, w2, b2, *, max_batch_tile=1024,
              epilogue_dtype=None, stream_buffers=2):
    """x: (B, D_in); w1: (D_in, H); wg: (H, H); w2: (H, D_out); biases (1, N).

    Weights are stored pre-transposed, so y = x @ W + b matches nn.Linear.
    Pass bf16 x/weights on any generation to halve HBM/VMEM traffic (MXU
    accumulates in f32 either way; gate/out dtype follows x.dtype).
    Returns (out (B, D_out), gate (B, H)).
    """
    B, D_in = x.shape
    H = w1.shape[1]
    D_out = w2.shape[1]

    out_dtype = x.dtype
    gate_dtype = x.dtype
    if epilogue_dtype is None:
        # Exact f32 epilogue for f32 inputs; reduced-precision epilogue when
        # the caller already opted into bf16 activations.
        epilogue_dtype = jnp.float32 if x.dtype == jnp.float32 else x.dtype

    # Lane-align the feature dims (MXU width / lane-dense stores).
    D_in_p = _round_up(D_in, _LANE)
    H_p = _round_up(H, _LANE)
    D_out_p = _round_up(D_out, _LANE)

    # Generation-aware scoped-VMEM limit: ~75% of per-TC VMEM (~48 MiB v7x,
    # ~96 MiB v5e/v6e); the tiler keeps 4 MiB headroom for internal scratch.
    vmem_cap, two_tc = _tpu_vmem_info()
    vmem_limit = min(int(vmem_cap) * 3 // 4, 100 << 20)
    budget = vmem_limit - (4 << 20)

    x_bytes = jnp.dtype(x.dtype).itemsize
    w_bytes = jnp.dtype(w1.dtype).itemsize
    out_bytes = jnp.dtype(out_dtype).itemsize
    gate_bytes = jnp.dtype(gate_dtype).itemsize
    TB = _pick_batch_tile(B, D_in_p, H_p, D_out_p, x_bytes, w_bytes, out_bytes,
                          gate_bytes, max_tile=max_batch_tile,
                          budget_bytes=budget, two_tc=two_tc,
                          stream_buffers=stream_buffers)
    B_p = _round_up(B, TB)

    # Zero-pad to aligned shapes (zeros do not perturb the math; padded
    # rows/cols are sliced away below, and both are no-ops when already
    # aligned).
    x_p = _pad2d(x, B_p, D_in_p)
    w1_p = _pad2d(w1, D_in_p, H_p)
    b1_p = _pad2d(b1, 1, H_p)
    wg_p = _pad2d(wg, H_p, H_p)
    bg_p = _pad2d(bg, 1, H_p)
    w2_p = _pad2d(w2, H_p, D_out_p)
    b2_p = _pad2d(b2, 1, D_out_p)

    grid = (B_p // TB,)

    def batch_spec(cols):
        if stream_buffers == 2:
            return pl.BlockSpec((TB, cols), lambda i: (i, 0))
        return pl.BlockSpec((TB, cols), lambda i: (i, 0),
                            pipeline_mode=pl.Buffered(stream_buffers))

    def const_spec(shape):
        # Constant index_map -> VMEM-resident across all grid steps; a single
        # buffer suffices (double-buffering a fixed block is pure VMEM waste).
        return pl.BlockSpec(shape, lambda i: (0, 0),
                            pipeline_mode=pl.Buffered(1))

    flops = 2 * B_p * (D_in_p * H_p + H_p * H_p + H_p * D_out_p)
    bytes_accessed = int(x_p.nbytes + w1_p.nbytes + b1_p.nbytes + wg_p.nbytes
                         + bg_p.nbytes + w2_p.nbytes + b2_p.nbytes
                         + B_p * D_out_p * out_bytes + B_p * H_p * gate_bytes)
    cost = pl.CostEstimate(flops=int(flops), transcendentals=int(B_p * H_p),
                           bytes_accessed=bytes_accessed)

    kernel = functools.partial(gated_mlp_kernel, epi_dtype=epilogue_dtype)

    out_p, gate_p = pl.pallas_call(
        kernel,
        out_shape=(
            jax.ShapeDtypeStruct((B_p, D_out_p), out_dtype),
            jax.ShapeDtypeStruct((B_p, H_p), gate_dtype),
        ),
        grid=grid,
        in_specs=[
            batch_spec(D_in_p),
            const_spec(w1_p.shape), const_spec(b1_p.shape),
            const_spec(wg_p.shape), const_spec(bg_p.shape),
            const_spec(w2_p.shape), const_spec(b2_p.shape),
        ],
        out_specs=(batch_spec(D_out_p), batch_spec(H_p)),
        compiler_params=pltpu.CompilerParams(
            dimension_semantics=("parallel",),
            vmem_limit_bytes=int(vmem_limit)),
        cost_estimate=cost,
    )(x_p, w1_p, b1_p, wg_p, bg_p, w2_p, b2_p)

    out = out_p if (B_p == B and D_out_p == D_out) else out_p[:B, :D_out]
    gate = gate_p if (B_p == B and H_p == H) else gate_p[:B, :H]
    return out, gate


def init_linear_params(key, in_features, out_features):
    """Deterministic init mimicking nn.Linear default (uniform +-1/sqrt(in))."""
    kw, kb = jax.random.split(key)
    bound = 1.0 / math.sqrt(in_features)
    # Stored transposed: (in_features, out_features).
    w = jax.random.uniform(kw, (in_features, out_features), jnp.float32,
                           minval=-bound, maxval=bound)
    b = jax.random.uniform(kb, (1, out_features), jnp.float32,
                           minval=-bound, maxval=bound)
    return w, b


if __name__ == "__main__":
    key = jax.random.PRNGKey(0)
    k_x, k1, k2, k3 = jax.random.split(key, 4)

    batch, input_dim, hidden_dim, output_dim = 8, 32, 64, 16

    x = jax.random.normal(k_x, (batch, input_dim), jnp.float32)
    w1, b1 = init_linear_params(k1, input_dim, hidden_dim)
    wg, bg = init_linear_params(k2, hidden_dim, hidden_dim)
    w2, b2 = init_linear_params(k3, hidden_dim, output_dim)

    out, gate_val = gated_mlp(x, w1, b1, wg, bg, w2, b2)
    jax.block_until_ready((out, gate_val))

    # Reference check in plain JAX (f32 inputs -> exact f32 epilogue path).
    h1_ref = jnp.maximum(x @ w1 + b1, 0.0)
    gate_ref = jax.nn.sigmoid(h1_ref @ wg + bg)
    out_ref = (h1_ref * gate_ref) @ w2 + b2
    assert out.shape == (batch, output_dim) and gate_val.shape == (batch, hidden_dim)
    assert jnp.allclose(out, out_ref, atol=1e-4), "output mismatch"
    assert jnp.allclose(gate_val, gate_ref, atol=1e-4), "gate mismatch"

    print("KERNEL_OK")
</pallas_src>

<mosaic_0001>
module attributes {stable_mosaic.version = 11 : i64} {
  func.func @gated_mlp_kernel(%arg0: i32, %arg1: memref<8x128xf32, #tpu.memory_space<vmem>>, %arg2: memref<128x128xf32, #tpu.memory_space<vmem>>, %arg3: memref<1x128xf32, #tpu.memory_space<vmem>>, %arg4: memref<128x128xf32, #tpu.memory_space<vmem>>, %arg5: memref<1x128xf32, #tpu.memory_space<vmem>>, %arg6: memref<128x128xf32, #tpu.memory_space<vmem>>, %arg7: memref<1x128xf32, #tpu.memory_space<vmem>>, %arg8: memref<8x128xf32, #tpu.memory_space<vmem>>, %arg9: memref<8x128xf32, #tpu.memory_space<vmem>>) attributes {dimension_semantics = [#tpu.dimension_semantics<parallel>], iteration_bounds = array<i64: 1>, scalar_prefetch = 0 : i64, scratch_operands = 0 : i64, tpu.core_type = #tpu.core_type<tc>, window_params = [{transform_indices = @transform_0, window_bounds = array<i64: 8, 128>}, {pipeline_mode = #tpu.pipeline_mode<synchronous>, transform_indices = @transform_1, window_bounds = array<i64: 128, 128>}, {pipeline_mode = #tpu.pipeline_mode<synchronous>, transform_indices = @transform_2, window_bounds = array<i64: 1, 128>}, {pipeline_mode = #tpu.pipeline_mode<synchronous>, transform_indices = @transform_3, window_bounds = array<i64: 128, 128>}, {pipeline_mode = #tpu.pipeline_mode<synchronous>, transform_indices = @transform_4, window_bounds = array<i64: 1, 128>}, {pipeline_mode = #tpu.pipeline_mode<synchronous>, transform_indices = @transform_5, window_bounds = array<i64: 128, 128>}, {pipeline_mode = #tpu.pipeline_mode<synchronous>, transform_indices = @transform_6, window_bounds = array<i64: 1, 128>}, {transform_indices = @transform_7, window_bounds = array<i64: 8, 128>}, {transform_indices = @transform_8, window_bounds = array<i64: 8, 128>}]} {
    %c0 = arith.constant 0 : index
    %c0_0 = arith.constant 0 : index
    %0 = vector.load %arg1[%c0, %c0_0] : memref<8x128xf32, #tpu.memory_space<vmem>>, vector<8x128xf32>
    %c0_1 = arith.constant 0 : index
    %c0_2 = arith.constant 0 : index
    %1 = vector.load %arg2[%c0_1, %c0_2] : memref<128x128xf32, #tpu.memory_space<vmem>>, vector<128x128xf32>
    %cst = arith.constant dense<0.000000e+00> : vector<8x128xf32>
    %2 = tpu.matmul %0, %1, %cst {dimension_numbers = #tpu.dot_dimension_numbers<[1], [0], [0], [1], [0, 0, 1, 1], [], []>} : vector<8x128xf32>, vector<128x128xf32>, vector<8x128xf32> -> vector<8x128xf32>
    %c0_3 = arith.constant 0 : index
    %c0_4 = arith.constant 0 : index
    %3 = vector.load %arg3[%c0_3, %c0_4] : memref<1x128xf32, #tpu.memory_space<vmem>>, vector<1x128xf32>
    %4 = vector.broadcast %3 : vector<1x128xf32> to vector<8x128xf32>
    %5 = arith.addf %2, %4 : vector<8x128xf32>
    %cst_5 = arith.constant 0.000000e+00 : f32
    %6 = vector.broadcast %cst_5 : f32 to vector<8x128xf32>
    %7 = arith.maximumf %5, %6 : vector<8x128xf32>
    %c0_6 = arith.constant 0 : index
    %c0_7 = arith.constant 0 : index
    %8 = vector.load %arg4[%c0_6, %c0_7] : memref<128x128xf32, #tpu.memory_space<vmem>>, vector<128x128xf32>
    %cst_8 = arith.constant dense<0.000000e+00> : vector<8x128xf32>
    %9 = tpu.matmul %7, %8, %cst_8 {dimension_numbers = #tpu.dot_dimension_numbers<[1], [0], [0], [1], [0, 0, 1, 1], [], []>} : vector<8x128xf32>, vector<128x128xf32>, vector<8x128xf32> -> vector<8x128xf32>
    %c0_9 = arith.constant 0 : index
    %c0_10 = arith.constant 0 : index
    %10 = vector.load %arg5[%c0_9, %c0_10] : memref<1x128xf32, #tpu.memory_space<vmem>>, vector<1x128xf32>
    %11 = vector.broadcast %10 : vector<1x128xf32> to vector<8x128xf32>
    %12 = arith.addf %9, %11 : vector<8x128xf32>
    %13 = arith.negf %12 : vector<8x128xf32>
    %14 = math.exp %13 : vector<8x128xf32>
    %cst_11 = arith.constant 1.000000e+00 : f32
    %15 = vector.broadcast %cst_11 : f32 to vector<8x128xf32>
    %16 = arith.addf %15, %14 : vector<8x128xf32>
    %17 = arith.divf %15, %16 : vector<8x128xf32>
    %c0_12 = arith.constant 0 : index
    %c0_13 = arith.constant 0 : index
    %18 = vector.load %arg9[%c0_12, %c0_13] : memref<8x128xf32, #tpu.memory_space<vmem>>, vector<8x128xf32>
    tpu.vector_store %arg9[%c0_12, %c0_13], %17 {strides = array<i32>} : memref<8x128xf32, #tpu.memory_space<vmem>>, vector<8x128xf32>,
    %19 = arith.mulf %7, %17 : vector<8x128xf32>
    %c0_14 = arith.constant 0 : index
    %c0_15 = arith.constant 0 : index
    %20 = vector.load %arg6[%c0_14, %c0_15] : memref<128x128xf32, #tpu.memory_space<vmem>>, vector<128x128xf32>
    %cst_16 = arith.constant dense<0.000000e+00> : vector<8x128xf32>
    %21 = tpu.matmul %19, %20, %cst_16 {dimension_numbers = #tpu.dot_dimension_numbers<[1], [0], [0], [1], [0, 0, 1, 1], [], []>} : vector<8x128xf32>, vector<128x128xf32>, vector<8x128xf32> -> vector<8x128xf32>
    %c0_17 = arith.constant 0 : index
    %c0_18 = arith.constant 0 : index
    %22 = vector.load %arg7[%c0_17, %c0_18] : memref<1x128xf32, #tpu.memory_space<vmem>>, vector<1x128xf32>
    %23 = vector.broadcast %22 : vector<1x128xf32> to vector<8x128xf32>
    %24 = arith.addf %21, %23 : vector<8x128xf32>
    %c0_19 = arith.constant 0 : index
    %c0_20 = arith.constant 0 : index
    %25 = vector.load %arg8[%c0_19, %c0_20] : memref<8x128xf32, #tpu.memory_space<vmem>>, vector<8x128xf32>
    tpu.vector_store %arg8[%c0_19, %c0_20], %24 {strides = array<i32>} : memref<8x128xf32, #tpu.memory_space<vmem>>, vector<8x128xf32>,
    return
  }
  func.func @transform_0(%arg0: i32) -> (i32, i32) {
    %c0_i32 = arith.constant 0 : i32
    %c0_i32_0 = arith.constant 0 : i32
    return %arg0, %c0_i32 : i32, i32
  }
  func.func @transform_1(%arg0: i32) -> (i32, i32) {
    %c0_i32 = arith.constant 0 : i32
    %c0_i32_0 = arith.constant 0 : i32
    %c0_i32_1 = arith.constant 0 : i32
    return %c0_i32, %c0_i32_0 : i32, i32
  }
  func.func @transform_2(%arg0: i32) -> (i32, i32) {
    %c0_i32 = arith.constant 0 : i32
    %c0_i32_0 = arith.constant 0 : i32
    %c0_i32_1 = arith.constant 0 : i32
    return %c0_i32, %c0_i32_0 : i32, i32
  }
  func.func @transform_3(%arg0: i32) -> (i32, i32) {
    %c0_i32 = arith.constant 0 : i32
    %c0_i32_0 = arith.constant 0 : i32
    %c0_i32_1 = arith.constant 0 : i32
    return %c0_i32, %c0_i32_0 : i32, i32
  }
  func.func @transform_4(%arg0: i32) -> (i32, i32) {
    %c0_i32 = arith.constant 0 : i32
    %c0_i32_0 = arith.constant 0 : i32
    %c0_i32_1 = arith.constant 0 : i32
    return %c0_i32, %c0_i32_0 : i32, i32
  }
  func.func @transform_5(%arg0: i32) -> (i32, i32) {
    %c0_i32 = arith.constant 0 : i32
    %c0_i32_0 = arith.constant 0 : i32
    %c0_i32_1 = arith.constant 0 : i32
    return %c0_i32, %c0_i32_0 : i32, i32
  }
  func.func @transform_6(%arg0: i32) -> (i32, i32) {
    %c0_i32 = arith.constant 0 : i32
    %c0_i32_0 = arith.constant 0 : i32
    %c0_i32_1 = arith.constant 0 : i32
    return %c0_i32, %c0_i32_0 : i32, i32
  }
  func.func @transform_7(%arg0: i32) -> (i32, i32) {
    %c0_i32 = arith.constant 0 : i32
    %c0_i32_0 = arith.constant 0 : i32
    return %arg0, %c0_i32 : i32, i32
  }
  func.func @transform_8(%arg0: i32) -> (i32, i32) {
    %c0_i32 = arith.constant 0 : i32
    %c0_i32_0 = arith.constant 0 : i32
    return %arg0, %c0_i32 : i32, i32
  }
}

</mosaic_0001>

<llo_original>
// kernel: tpu_custom_call.1
$region0: #{tpu_custom_call.1}
  #allocation0 [shape = 'u32[]', space=smem, size = 0x4, offset = 0x4, fixed_abs, tag = 'smem constant byte address 0x4 - core index']
  #allocation1 [shape = 'u32[144,128]{1,0:T(1,128)}', space=vmem, size = 0x12000, scoped, tag = 'internal scratch']
  %s0 = inlined_call_operand.hbm [shape: f32[8,128], index: 0, kind: input, shape index: {}]
  %s1 = inlined_call_operand.hbm [shape: f32[128,128], index: 1, kind: input, shape index: {}]
  %s2 = inlined_call_operand.vmem [shape: f32[1,128], index: 2, kind: input, shape index: {}]
  %s3 = inlined_call_operand.hbm [shape: f32[128,128], index: 3, kind: input, shape index: {}]
  %s4 = inlined_call_operand.vmem [shape: f32[1,128], index: 4, kind: input, shape index: {}]
  %s5 = inlined_call_operand.hbm [shape: f32[128,128], index: 5, kind: input, shape index: {}]
  %s6 = inlined_call_operand.vmem [shape: f32[1,128], index: 6, kind: input, shape index: {}]
  %s7 = inlined_call_operand.hbm [shape: f32[8,128], index: 7, kind: output, shape index: {0}]
  %s8 = inlined_call_operand.hbm [shape: f32[8,128], index: 8, kind: output, shape index: {1}]
  %9 = xla_tuple %s7, %s8
  %s10 = sld [smem:[#allocation0]]
  $region62: #{tpu_custom_call.1} parent=0
    _
  %s12 = ssub.s32 1, %s10
  %s13 = scalar_select 0, %s12, %s10
  $region1: #{tpu_custom_call.1} parent=0
    #allocation2 [shape = 'u8[4096]{0}', space=vmem, size = 0x1000, scoped, tag = 'input window, operand 0, single buffered']
    #allocation3 [shape = 's32[1]{0}', space=sflag, size = 0x4, scoped, tag = 'scoped memory for tpu_custom_call.1']
    #allocation4 [shape = 's32[1]{0}', space=sflag, size = 0x4, scoped, tag = 'scoped memory for tpu_custom_call.1']
    #allocation5 [shape = 'u8[65536]{0}', space=vmem, size = 0x10000, scoped, tag = 'input window, operand 1, single buffered']
    #allocation6 [shape = 's32[1]{0}', space=sflag, size = 0x4, scoped, tag = 'scoped memory for tpu_custom_call.1']
    #allocation7 [shape = 'u8[65536]{0}', space=vmem, size = 0x10000, scoped, tag = 'input window, operand 3, single buffered']
    #allocation8 [shape = 'u8[65536]{0}', space=vmem, size = 0x10000, scoped, tag = 'input window, operand 5, single buffered']
    #allocation9 [shape = 's32[1]{0}', space=sflag, size = 0x4, scoped, tag = 'scoped memory for tpu_custom_call.1']
    #allocation10 [shape = 'u8[4096]{0}', space=vmem, size = 0x1000, scoped, tag = 'output window, operand 0, single buffered']
    #allocation11 [shape = 'u8[4096]{0}', space=vmem, size = 0x1000, scoped, tag = 'output window, operand 1, single buffered']
    #allocation12 [shape = 's32[1]{0}', space=sflag, size = 0x4, scoped, tag = 'scoped memory for tpu_custom_call.1']
    %14 = vsyncpa [#allocation3], 0
    %15 = vsyncpa [#allocation6], 0
    %16 = vsyncpa [#allocation9], 0
    %17 = vsyncpa [#allocation4], 0
    %18 = vsyncpa [#allocation12], 0
    // Predicated region
    $region2: #{tpu_custom_call.1} parent=1 // pred_check
      _
    $region3: #{tpu_custom_call.1} parent=1 // pred_check_branch
      %20 = sbr.rel (0) target = $region5
    $region4: #{tpu_custom_call.1} parent=1 // pred_region
      %s22 = ssub.s32 128, 128
      %23 = vsyncadd [#allocation3], %s22
      %s25 = sshll.u32 [#allocation2], 4
      %s26 = int_to_ptr.vmem [resolvable:$true] %s25
      %28 = dma.hbm_to_vmem [thread:$0]  %s0, 128, %s26, [#allocation3]
    $region5: #{tpu_custom_call.1} parent=1 // pred_fallthru
      _
    // Predicated region
    $region6: #{tpu_custom_call.1} parent=1 // pred_check
      _
    $region7: #{tpu_custom_call.1} parent=1 // pred_check_branch
      %30 = sbr.rel (0) target = $region9
    $region8: #{tpu_custom_call.1} parent=1 // pred_region
      %s32 = ssub.s32 2048, 2048
      %33 = vsyncadd [#allocation6], %s32
      %s34 = sshll.u32 [#allocation5], 4
      %s35 = int_to_ptr.vmem [resolvable:$true] %s34
      %40 = dma.hbm_to_vmem [thread:$0]  %s1, 2048, %s35, [#allocation6], 128, 128, 8
    $region9: #{tpu_custom_call.1} parent=1 // pred_fallthru
      _
    // Predicated region
    $region10: #{tpu_custom_call.1} parent=1 // pred_check
      _
    $region11: #{tpu_custom_call.1} parent=1 // pred_check_branch
      %42 = sbr.rel (0) target = $region13
    $region12: #{tpu_custom_call.1} parent=1 // pred_region
      _
    $region13: #{tpu_custom_call.1} parent=1 // pred_fallthru
      _
    // Predicated region
    $region14: #{tpu_custom_call.1} parent=1 // pred_check
      _
    $region15: #{tpu_custom_call.1} parent=1 // pred_check_branch
      %44 = sbr.rel (0) target = $region17
    $region16: #{tpu_custom_call.1} parent=1 // pred_region
      %s46 = ssub.s32 2048, 2048
      %47 = vsyncadd [#allocation6], %s46
      %s48 = sshll.u32 [#allocation7], 4
      %s49 = int_to_ptr.vmem [resolvable:$true] %s48
      %54 = dma.hbm_to_vmem [thread:$0]  %s3, 2048, %s49, [#allocation6], 128, 128, 8
    $region17: #{tpu_custom_call.1} parent=1 // pred_fallthru
      _
    // Predicated region
    $region18: #{tpu_custom_call.1} parent=1 // pred_check
      _
    $region19: #{tpu_custom_call.1} parent=1 // pred_check_branch
      %56 = sbr.rel (0) target = $region21
    $region20: #{tpu_custom_call.1} parent=1 // pred_region
      _
    $region21: #{tpu_custom_call.1} parent=1 // pred_fallthru
      _
    // Predicated region
    $region22: #{tpu_custom_call.1} parent=1 // pred_check
      _
    $region23: #{tpu_custom_call.1} parent=1 // pred_check_branch
      %58 = sbr.rel (0) target = $region25
    $region24: #{tpu_custom_call.1} parent=1 // pred_region
      %s60 = ssub.s32 2048, 2048
      %61 = vsyncadd [#allocation9], %s60
      %s62 = sshll.u32 [#allocation8], 4
      %s63 = int_to_ptr.vmem [resolvable:$true] %s62
      %68 = dma.hbm_to_vmem [thread:$0]  %s5, 2048, %s63, [#allocation9], 128, 128, 8
    $region25: #{tpu_custom_call.1} parent=1 // pred_fallthru
      _
    // Predicated region
    $region26: #{tpu_custom_call.1} parent=1 // pred_check
      _
    $region27: #{tpu_custom_call.1} parent=1 // pred_check_branch
      %70 = sbr.rel (0) target = $region29
    $region28: #{tpu_custom_call.1} parent=1 // pred_region
      _
    $region29: #{tpu_custom_call.1} parent=1 // pred_fallthru
      _
    // Predicated region
    $region30: #{tpu_custom_call.1} parent=1 // pred_check
      _
    $region31: #{tpu_custom_call.1} parent=1 // pred_check_branch
      %72 = sbr.rel (0) target = $region33
    $region32: #{tpu_custom_call.1} parent=1 // pred_region
      %73 = dma.done [#allocation3], 128
    $region33: #{tpu_custom_call.1} parent=1 // pred_fallthru
      _
    // Predicated region
    $region34: #{tpu_custom_call.1} parent=1 // pred_check
      _
    $region35: #{tpu_custom_call.1} parent=1 // pred_check_branch
      %75 = sbr.rel (0) target = $region37
    $region36: #{tpu_custom_call.1} parent=1 // pred_region
      %76 = dma.done [#allocation6], 2048
    $region37: #{tpu_custom_call.1} parent=1 // pred_fallthru
      _
    // Predicated region
    $region38: #{tpu_custom_call.1} parent=1 // pred_check
      _
    $region39: #{tpu_custom_call.1} parent=1 // pred_check_branch
      %78 = sbr.rel (0) target = $region41
    $region40: #{tpu_custom_call.1} parent=1 // pred_region
      %79 = dma.done [#allocation6], 2048
    $region41: #{tpu_custom_call.1} parent=1 // pred_fallthru
      _
    // Predicated region
    $region42: #{tpu_custom_call.1} parent=1 // pred_check
      _
    $region43: #{tpu_custom_call.1} parent=1 // pred_check_branch
      %81 = sbr.rel (0) target = $region45
    $region44: #{tpu_custom_call.1} parent=1 // pred_region
      %82 = dma.done [#allocation9], 2048
    $region45: #{tpu_custom_call.1} parent=1 // pred_fallthru
      _
    %v83 = vld [vmem:[#allocation2] sm:$0xff]
    %v84 = vld [vmem:[#allocation5] sm:$0xff]
    %v85 = vld [vmem:[#allocation5 + $0x8] sm:$0xff]
    %v86 = vld [vmem:[#allocation5 + $0x10] sm:$0xff]
    %v87 = vld [vmem:[#allocation5 + $0x18] sm:$0xff]
    %v88 = vld [vmem:[#allocation5 + $0x20] sm:$0xff]
    %v89 = vld [vmem:[#allocation5 + $0x28] sm:$0xff]
    %v90 = vld [vmem:[#allocation5 + $0x30] sm:$0xff]
    %v91 = vld [vmem:[#allocation5 + $0x38] sm:$0xff]
    %v92 = vld [vmem:[#allocation5 + $0x40] sm:$0xff]
    %v93 = vld [vmem:[#allocation5 + $0x48] sm:$0xff]
    %v94 = vld [vmem:[#allocation5 + $0x50] sm:$0xff]
    %v95 = vld [vmem:[#allocation5 + $0x58] sm:$0xff]
    %v96 = vld [vmem:[#allocation5 + $0x60] sm:$0xff]
    %v97 = vld [vmem:[#allocation5 + $0x68] sm:$0xff]
    %v98 = vld [vmem:[#allocation5 + $0x70] sm:$0xff]
    %v99 = vld [vmem:[#allocation5 + $0x78] sm:$0xff]
    %v100 = vld [vmem:[%s2] sm:$0x1]
    %v102 = vlaneseq
    %v103 = vshrl.u32 %v102, 7
    %v104 = vsub.s32 0, %v103
    %v105 = vrot.slane %v100, %v104
    %107 = vmatprep.subr.mxu0 0.0
    %108 = vmatpush1.msra.mxu0 %v84
    %109 = vmatprep.subr.mxu0 0.0
    %110 = vmatpush1.msra.mxu0 %v85
    %111 = vmatprep.subr.mxu0 0.0
    %112 = vmatpush1.msra.mxu0 %v86
    %113 = vmatprep.subr.mxu0 0.0
    %114 = vmatpush1.msra.mxu0 %v87
    %115 = vmatprep.subr.mxu0 0.0
    %116 = vmatpush1.msra.mxu0 %v88
    %117 = vmatprep.subr.mxu0 0.0
    %118 = vmatpush1.msra.mxu0 %v89
    %119 = vmatprep.subr.mxu0 0.0
    %120 = vmatpush1.msra.mxu0 %v90
    %121 = vmatprep.subr.mxu0 0.0
    %122 = vmatpush1.msra.mxu0 %v91
    %123 = vmatprep.subr.mxu0 0.0
    %124 = vmatpush1.msra.mxu0 %v92
    %125 = vmatprep.subr.mxu0 0.0
    %126 = vmatpush1.msra.mxu0 %v93
    %127 = vmatprep.subr.mxu0 0.0
    %128 = vmatpush1.msra.mxu0 %v94
    %129 = vmatprep.subr.mxu0 0.0
    %130 = vmatpush1.msra.mxu0 %v95
    %131 = vmatprep.subr.mxu0 0.0
    %132 = vmatpush1.msra.mxu0 %v96
    %133 = vmatprep.subr.mxu0 0.0
    %134 = vmatpush1.msra.mxu0 %v97
    %135 = vmatprep.subr.mxu0 0.0
    %136 = vmatpush1.msra.mxu0 %v98
    %137 = vmatprep.subr.mxu0 0.0
    %138 = vmatpush1.msra.mxu0 %v99
    %139 = vmatprep.subr.mxu0 0.0
    %140 = vmatpush1.msra.mxu0 0.0
    %141 = vmatprep.subr.mxu0 0.0
    %142 = vmatpush1.msra.mxu0 0.0
    %143 = vmatprep.subr.mxu0 0.0
    %144 = vmatpush1.msra.mxu0 0.0
    %145 = vmatprep.subr.mxu0 0.0
    %146 = vmatpush1.msra.mxu0 0.0
    %147 = vmatprep.subr.mxu0 0.0
    %148 = vmatpush1.msra.mxu0 0.0
    %149 = vmatprep.subr.mxu0 0.0
    %150 = vmatpush1.msra.mxu0 0.0
    %151 = vmatprep.subr.mxu0 0.0
    %152 = vmatpush1.msra.mxu0 0.0
    %153 = vmatprep.subr.mxu0 0.0
    %154 = vmatpush1.msra.mxu0 0.0
    %155 = vmatprep.subr.mxu0 0.0
    %156 = vmatpush1.msra.mxu0 0.0
    %157 = vmatprep.subr.mxu0 0.0
    %158 = vmatpush1.msra.mxu0 0.0
    %159 = vmatprep.subr.mxu0 0.0
    %160 = vmatpush1.msra.mxu0 0.0
    %161 = vmatprep.subr.mxu0 0.0
    %162 = vmatpush1.msra.mxu0 0.0
    %163 = vmatprep.subr.mxu0 0.0
    %164 = vmatpush1.msra.mxu0 0.0
    %165 = vmatprep.subr.mxu0 0.0
    %166 = vmatpush1.msra.mxu0 0.0
    %167 = vmatprep.subr.mxu0 0.0
    %168 = vmatpush1.msra.mxu0 0.0
    %169 = vmatprep.subr.mxu0 0.0
    %170 = vmatpush1.msra.mxu0 0.0
    %171 = vmatprep.mubr.f32.mxu0 0.0
    %172 = vmatmul.mubr.f32.gmra.mrb[0].mxu0 %v83
    %v173 = vpop.f32.mrb[0].mxu0
    %v174 = vadd.f32 %v105, %v173
    %v175 = vpop.f32.mrb[0].mxu0
    %176 = vdwg.mxu0
    %v177 = vmax.f32 %v174, 0.0
    %v178 = vld [vmem:[#allocation7] sm:$0xff]
    %v179 = vld [vmem:[#allocation7 + $0x8] sm:$0xff]
    %v180 = vld [vmem:[#allocation7 + $0x10] sm:$0xff]
    %v181 = vld [vmem:[#allocation7 + $0x18] sm:$0xff]
    %v182 = vld [vmem:[#allocation7 + $0x20] sm:$0xff]
    %v183 = vld [vmem:[#allocation7 + $0x28] sm:$0xff]
    %v184 = vld [vmem:[#allocation7 + $0x30] sm:$0xff]
    %v185 = vld [vmem:[#allocation7 + $0x38] sm:$0xff]
    %v186 = vld [vmem:[#allocation7 + $0x40] sm:$0xff]
    %v187 = vld [vmem:[#allocation7 + $0x48] sm:$0xff]
    %v188 = vld [vmem:[#allocation7 + $0x50] sm:$0xff]
    %v189 = vld [vmem:[#allocation7 + $0x58] sm:$0xff]
    %v190 = vld [vmem:[#allocation7 + $0x60] sm:$0xff]
    %v191 = vld [vmem:[#allocation7 + $0x68] sm:$0xff]
    %v192 = vld [vmem:[#allocation7 + $0x70] sm:$0xff]
    %v193 = vld [vmem:[#allocation7 + $0x78] sm:$0xff]
    %v194 = vld [vmem:[%s4] sm:$0x1]
    %v196 = vlaneseq
    %v197 = vshrl.u32 %v196, 7
    %v198 = vsub.s32 0, %v197
    %v199 = vrot.slane %v194, %v198
    %201 = vmatprep.subr.mxu0 0.0
    %202 = vmatpush1.msra.mxu0 %v178
    %203 = vmatprep.subr.mxu0 0.0
    %204 = vmatpush1.msra.mxu0 %v179
    %205 = vmatprep.subr.mxu0 0.0
    %206 = vmatpush1.msra.mxu0 %v180
    %207 = vmatprep.subr.mxu0 0.0
    %208 = vmatpush1.msra.mxu0 %v181
    %209 = vmatprep.subr.mxu0 0.0
    %210 = vmatpush1.msra.mxu0 %v182
    %211 = vmatprep.subr.mxu0 0.0
    %212 = vmatpush1.msra.mxu0 %v183
    %213 = vmatprep.subr.mxu0 0.0
    %214 = vmatpush1.msra.mxu0 %v184
    %215 = vmatprep.subr.mxu0 0.0
    %216 = vmatpush1.msra.mxu0 %v185
    %217 = vmatprep.subr.mxu0 0.0
    %218 = vmatpush1.msra.mxu0 %v186
    %219 = vmatprep.subr.mxu0 0.0
    %220 = vmatpush1.msra.mxu0 %v187
    %221 = vmatprep.subr.mxu0 0.0
    %222 = vmatpush1.msra.mxu0 %v188
    %223 = vmatprep.subr.mxu0 0.0
    %224 = vmatpush1.msra.mxu0 %v189
    %225 = vmatprep.subr.mxu0 0.0
    %226 = vmatpush1.msra.mxu0 %v190
    %227 = vmatprep.subr.mxu0 0.0
    %228 = vmatpush1.msra.mxu0 %v191
    %229 = vmatprep.subr.mxu0 0.0
    %230 = vmatpush1.msra.mxu0 %v192
    %231 = vmatprep.subr.mxu0 0.0
    %232 = vmatpush1.msra.mxu0 %v193
    %233 = vmatprep.subr.mxu0 0.0
    %234 = vmatpush1.msra.mxu0 0.0
    %235 = vmatprep.subr.mxu0 0.0
    %236 = vmatpush1.msra.mxu0 0.0
    %237 = vmatprep.subr.mxu0 0.0
    %238 = vmatpush1.msra.mxu0 0.0
    %239 = vmatprep.subr.mxu0 0.0
    %240 = vmatpush1.msra.mxu0 0.0
    %241 = vmatprep.subr.mxu0 0.0
    %242 = vmatpush1.msra.mxu0 0.0
    %243 = vmatprep.subr.mxu0 0.0
    %244 = vmatpush1.msra.mxu0 0.0
    %245 = vmatprep.subr.mxu0 0.0
    %246 = vmatpush1.msra.mxu0 0.0
    %247 = vmatprep.subr.mxu0 0.0
    %248 = vmatpush1.msra.mxu0 0.0
    %249 = vmatprep.subr.mxu0 0.0
    %250 = vmatpush1.msra.mxu0 0.0
    %251 = vmatprep.subr.mxu0 0.0
    %252 = vmatpush1.msra.mxu0 0.0
    %253 = vmatprep.subr.mxu0 0.0
    %254 = vmatpush1.msra.mxu0 0.0
    %255 = vmatprep.subr.mxu0 0.0
    %256 = vmatpush1.msra.mxu0 0.0
    %257 = vmatprep.subr.mxu0 0.0
    %258 = vmatpush1.msra.mxu0 0.0
    %259 = vmatprep.subr.mxu0 0.0
    %260 = vmatpush1.msra.mxu0 0.0
    %261 = vmatprep.subr.mxu0 0.0
    %262 = vmatpush1.msra.mxu0 0.0
    %263 = vmatprep.subr.mxu0 0.0
    %264 = vmatpush1.msra.mxu0 0.0
    %265 = vmatprep.mubr.f32.mxu0 0.0
    %266 = vmatmul.mubr.f32.gmra.mrb[0].mxu0 %v177
    %v267 = vpop.f32.mrb[0].mxu0
    %v268 = vadd.f32 %v199, %v267
    %v269 = vpop.f32.mrb[0].mxu0
    %270 = vdwg.mxu0
    %v271 = vxor.u32 %v268, 2147483648
    %v272 = vmul.f32 %v271, 1.442695
    %v273 = vpow.pop %v272
    %v274 = vadd.f32 %v273, 1.0
    %v275 = vrcp.pop %v274
    %v276 = vmul.f32 1.0, %v275
    %277 = vst [vmem:[#allocation11] sm:$0xff] %v276
    %v278 = vmul.f32 %v177, %v276
    %v279 = vld [vmem:[#allocation8] sm:$0xff]
    %v280 = vld [vmem:[#allocation8 + $0x8] sm:$0xff]
    %v281 = vld [vmem:[#allocation8 + $0x10] sm:$0xff]
    %v282 = vld [vmem:[#allocation8 + $0x18] sm:$0xff]
    %v283 = vld [vmem:[#allocation8 + $0x20] sm:$0xff]
    %v284 = vld [vmem:[#allocation8 + $0x28] sm:$0xff]
    %v285 = vld [vmem:[#allocation8 + $0x30] sm:$0xff]
    %v286 = vld [vmem:[#allocation8 + $0x38] sm:$0xff]
    %v287 = vld [vmem:[#allocation8 + $0x40] sm:$0xff]
    %v288 = vld [vmem:[#allocation8 + $0x48] sm:$0xff]
    %v289 = vld [vmem:[#allocation8 + $0x50] sm:$0xff]
    %v290 = vld [vmem:[#allocation8 + $0x58] sm:$0xff]
    %v291 = vld [vmem:[#allocation8 + $0x60] sm:$0xff]
    %v292 = vld [vmem:[#allocation8 + $0x68] sm:$0xff]
    %v293 = vld [vmem:[#allocation8 + $0x70] sm:$0xff]
    %v294 = vld [vmem:[#allocation8 + $0x78] sm:$0xff]
    %v295 = vld [vmem:[%s6] sm:$0x1]
    %v297 = vlaneseq
    %v298 = vshrl.u32 %v297, 7
    %v299 = vsub.s32 0, %v298
    %v300 = vrot.slane %v295, %v299
    %302 = vmatprep.subr.mxu0 0.0
    %303 = vmatpush1.msra.mxu0 %v279
    %304 = vmatprep.subr.mxu0 0.0
    %305 = vmatpush1.msra.mxu0 %v280
    %306 = vmatprep.subr.mxu0 0.0
    %307 = vmatpush1.msra.mxu0 %v281
    %308 = vmatprep.subr.mxu0 0.0
    %309 = vmatpush1.msra.mxu0 %v282
    %310 = vmatprep.subr.mxu0 0.0
    %311 = vmatpush1.msra.mxu0 %v283
    %312 = vmatprep.subr.mxu0 0.0
    %313 = vmatpush1.msra.mxu0 %v284
    %314 = vmatprep.subr.mxu0 0.0
    %315 = vmatpush1.msra.mxu0 %v285
    %316 = vmatprep.subr.mxu0 0.0
    %317 = vmatpush1.msra.mxu0 %v286
    %318 = vmatprep.subr.mxu0 0.0
    %319 = vmatpush1.msra.mxu0 %v287
    %320 = vmatprep.subr.mxu0 0.0
    %321 = vmatpush1.msra.mxu0 %v288
    %322 = vmatprep.subr.mxu0 0.0
    %323 = vmatpush1.msra.mxu0 %v289
    %324 = vmatprep.subr.mxu0 0.0
    %325 = vmatpush1.msra.mxu0 %v290
    %326 = vmatprep.subr.mxu0 0.0
    %327 = vmatpush1.msra.mxu0 %v291
    %328 = vmatprep.subr.mxu0 0.0
    %329 = vmatpush1.msra.mxu0 %v292
    %330 = vmatprep.subr.mxu0 0.0
    %331 = vmatpush1.msra.mxu0 %v293
    %332 = vmatprep.subr.mxu0 0.0
    %333 = vmatpush1.msra.mxu0 %v294
    %334 = vmatprep.subr.mxu0 0.0
    %335 = vmatpush1.msra.mxu0 0.0
    %336 = vmatprep.subr.mxu0 0.0
    %337 = vmatpush1.msra.mxu0 0.0
    %338 = vmatprep.subr.mxu0 0.0
    %339 = vmatpush1.msra.mxu0 0.0
    %340 = vmatprep.subr.mxu0 0.0
    %341 = vmatpush1.msra.mxu0 0.0
    %342 = vmatprep.subr.mxu0 0.0
    %343 = vmatpush1.msra.mxu0 0.0
    %344 = vmatprep.subr.mxu0 0.0
    %345 = vmatpush1.msra.mxu0 0.0
    %346 = vmatprep.subr.mxu0 0.0
    %347 = vmatpush1.msra.mxu0 0.0
    %348 = vmatprep.subr.mxu0 0.0
    %349 = vmatpush1.msra.mxu0 0.0
    %350 = vmatprep.subr.mxu0 0.0
    %351 = vmatpush1.msra.mxu0 0.0
    %352 = vmatprep.subr.mxu0 0.0
    %353 = vmatpush1.msra.mxu0 0.0
    %354 = vmatprep.subr.mxu0 0.0
    %355 = vmatpush1.msra.mxu0 0.0
    %356 = vmatprep.subr.mxu0 0.0
    %357 = vmatpush1.msra.mxu0 0.0
    %358 = vmatprep.subr.mxu0 0.0
    %359 = vmatpush1.msra.mxu0 0.0
    %360 = vmatprep.subr.mxu0 0.0
    %361 = vmatpush1.msra.mxu0 0.0
    %362 = vmatprep.subr.mxu0 0.0
    %363 = vmatpush1.msra.mxu0 0.0
    %364 = vmatprep.subr.mxu0 0.0
    %365 = vmatpush1.msra.mxu0 0.0
    %366 = vmatprep.mubr.f32.mxu0 0.0
    %367 = vmatmul.mubr.f32.gmra.mrb[0].mxu0 %v278
    %v368 = vpop.f32.mrb[0].mxu0
    %v369 = vadd.f32 %v300, %v368
    %v370 = vpop.f32.mrb[0].mxu0
    %371 = vdwg.mxu0
    %372 = vst [vmem:[#allocation10] sm:$0xff] %v369
    // Predicated region
    $region46: #{tpu_custom_call.1} parent=1 // pred_check
      _
    $region47: #{tpu_custom_call.1} parent=1 // pred_check_branch
      %374 = sbr.rel (0) target = $region49
    $region48: #{tpu_custom_call.1} parent=1 // pred_region
      %s376 = ssub.s32 128, 128
      %377 = vsyncadd [#allocation4], %s376
      %s379 = sshll.u32 [#allocation10], 4
      %s380 = int_to_ptr.vmem [resolvable:$true] %s379
      %382 = dma.vmem_to_hbm [thread:$0]  %s380, 128, %s7, [#allocation4]
    $region49: #{tpu_custom_call.1} parent=1 // pred_fallthru
      _
    // Predicated region
    $region50: #{tpu_custom_call.1} parent=1 // pred_check
      _
    $region51: #{tpu_custom_call.1} parent=1 // pred_check_branch
      %384 = sbr.rel (0) target = $region53
    $region52: #{tpu_custom_call.1} parent=1 // pred_region
      %s386 = ssub.s32 128, 128
      %387 = vsyncadd [#allocation12], %s386
      %s389 = sshll.u32 [#allocation11], 4
      %s390 = int_to_ptr.vmem [resolvable:$true] %s389
      %392 = dma.vmem_to_hbm [thread:$0]  %s390, 128, %s8, [#allocation12]
    $region53: #{tpu_custom_call.1} parent=1 // pred_fallthru
      _
    // Predicated region
    $region54: #{tpu_custom_call.1} parent=1 // pred_check
      _
    $region55: #{tpu_custom_call.1} parent=1 // pred_check_branch
      %394 = sbr.rel (0) target = $region57
    $region56: #{tpu_custom_call.1} parent=1 // pred_region
      %395 = dma.done [#allocation4], 128
    $region57: #{tpu_custom_call.1} parent=1 // pred_fallthru
      _
    // Predicated region
    $region58: #{tpu_custom_call.1} parent=1 // pred_check
      _
    $region59: #{tpu_custom_call.1} parent=1 // pred_check_branch
      %397 = sbr.rel (0) target = $region61
    $region60: #{tpu_custom_call.1} parent=1 // pred_region
      %398 = dma.done [#allocation12], 128
    $region61: #{tpu_custom_call.1} parent=1 // pred_fallthru
      _
    %399 = vsyncpa [#allocation3], 1
    %400 = vsyncpa [#allocation6], 1
    %401 = vsyncpa [#allocation9], 1
    %402 = vsyncpa [#allocation4], 1
    %403 = vsyncpa [#allocation12], 1

</llo_original>
